<compile_context>
chip_gen: v5e
topology: v5e:2x2
jax: 0.10.0
libtpu: 0.0.40
codegen_flags: <defaults>
</compile_context>

<pallas_src>
import jax
import jax.numpy as jnp
from jax.experimental import pallas as pl
from jax.experimental.pallas import tpu as pltpu

EPS = 1e-5
_VPU_MAX_CIN = 16     # Cin <= this: unrolled VPU FMAs (MXU K dim would be mostly idle)
_MAX_TILE_COLS = 8192  # cap on time-tile width (bounds in-kernel static unrolls)


def _vmem_budget_bytes():
    """Generation-aware VMEM budget: ~half of physical, capped at 64 MiB."""
    phys = 64 * 1024 * 1024
    try:
        info = pltpu.get_tpu_info()
        phys = int(getattr(info, "vmem_capacity_bytes", phys) or phys)
    except Exception:
        pass
    return min(phys // 2, 64 * 1024 * 1024)


def _round_up(v, m):
    return (v + m - 1) // m * m


def _choose_time_tile(cin, h, t_pad, budget):
    """Largest multiple-of-128 divisor of t_pad whose double-buffered working set
    (x-in + out tiles, f32) stays under ~half the VMEM budget."""
    bytes_per_col = 2 * (cin + h) * 4
    cap = max(128, min(_MAX_TILE_COLS, (budget // 2) // bytes_per_col))
    cap -= cap % 128
    cap = max(cap, 128)
    n128 = t_pad // 128
    best = 1
    for d in range(1, n128 + 1):
        if n128 % d == 0 and d * 128 <= cap:
            best = d
    return best * 128


def _choose_batch_block(n, cin, h, tt, t_pad, budget):
    """Fold several batch rows into one grid step when the grid is tiny, to
    amortize fixed per-step overhead (stays within the same VMEM budget)."""
    n_tt = t_pad // tt
    if n * n_tt >= 4:
        return 1
    bytes_per_row = 2 * (cin + h) * 4 * tt
    nb = 1
    for d in range(1, n + 1):
        if n % d == 0 and d * bytes_per_row <= budget // 2:
            nb = d
    return nb


def _affine_relu(x, w, b):
    """relu(w @ x + b) for one (Cin, Tt) slice; returns (H, Tt) f32."""
    cin = x.shape[0]
    xf = x.astype(jnp.float32)
    wf = w.astype(jnp.float32)
    bf = b.astype(jnp.float32)
    if cin <= _VPU_MAX_CIN:
        # Tiny contraction: unrolled broadcast multiply-adds on the VPU; the MXU
        # would waste almost all of its K dimension at Cin=4. (The per-channel
        # (H,1) lane-broadcast is only Cin ops per tile -- negligible vs HBM.)
        acc = wf[:, 0:1] * xf[0:1, :]
        for c in range(1, cin):
            acc = acc + wf[:, c:c + 1] * xf[c:c + 1, :]
    else:
        acc = jnp.dot(wf, xf, preferred_element_type=jnp.float32)
    return jnp.maximum(acc + bf, 0.0)


def tdnn_forward(x, weight, bias, *, eps=EPS, time_tile=None, batch_block=None,
                 out_dtype=None):
    """x: (N, Cin, T); weight: (H, Cin, 1); bias: (H,). Returns (N, H, T)."""
    N, Cin, T = x.shape
    H = weight.shape[0]
    out_dtype = x.dtype if out_dtype is None else out_dtype

    budget = _vmem_budget_bytes()
    T_pad = _round_up(T, 128)
    if time_tile is None:
        time_tile = _choose_time_tile(Cin, H, T_pad, budget)
    assert time_tile % 128 == 0 and T_pad % time_tile == 0, (
        "time_tile must be a multiple of 128 that divides round_up(T, 128)")
    if batch_block is None:
        batch_block = _choose_batch_block(N, Cin, H, time_tile, T_pad, budget)
    assert N % batch_block == 0, "batch_block must divide N"

    tt, Nb = time_tile, batch_block
    n_tt = T_pad // tt
    n_nb = N // Nb
    padded = T_pad != T

    xp = jnp.pad(x, ((0, 0), (0, 0), (0, T_pad - T))) if padded else x

    w2d = weight[:, :, 0].astype(jnp.float32)      # (H, Cin): conv1d(k=1) weight
    b2d = bias.reshape(H, 1).astype(jnp.float32)   # (H, 1)

    x_spec = pl.BlockSpec((Nb, Cin, tt), lambda n, t: (n, 0, t))
    w_spec = pl.BlockSpec((H, Cin), lambda n, t: (0, 0))
    col_spec = pl.BlockSpec((H, 1), lambda n, t: (0, 0))
    lane_spec = pl.BlockSpec((None, H, 128), lambda n, t: (n, 0, 0))

    # ---- Pass 1: per-batch-block lane-wide partial sum / sumsq over time ----
    def stats_kernel(x_ref, w_ref, b_ref, sum_ref, sumsq_ref):
        @pl.when(pl.program_id(1) == 0)
        def _init():
            sum_ref[...] = jnp.zeros_like(sum_ref)
            sumsq_ref[...] = jnp.zeros_like(sumsq_ref)

        w = w_ref[...]
        b = b_ref[...]
        if padded:
            t = pl.program_id(1)
            col = t * tt + jax.lax.broadcasted_iota(jnp.int32, (1, tt), 1)
            valid = col < T                     # lane mask of real (unpadded) cols

        s = jnp.zeros((H, 128), jnp.float32)
        s2 = jnp.zeros((H, 128), jnp.float32)
        for i in range(Nb):                     # static unroll over batch rows
            y = _affine_relu(x_ref[i], w, b)    # (H, tt) f32
            if padded:
                y = jnp.where(valid, y, 0.0)    # padded x=0 -> relu(b) != 0: mask
            # Lane-blocked partials: static aligned 128-wide slices -> pure VPU
            # adds into a lane-wide accumulator (no XLU cross-lane reduction).
            for j in range(tt // 128):
                yj = y[:, j * 128:(j + 1) * 128]
                s = s + yj
                s2 = s2 + yj * yj
        sum_ref[...] += s
        sumsq_ref[...] += s2

    sums, sumsqs = pl.pallas_call(
        stats_kernel,
        out_shape=(jax.ShapeDtypeStruct((n_nb, H, 128), jnp.float32),
                   jax.ShapeDtypeStruct((n_nb, H, 128), jnp.float32)),
        grid_spec=pltpu.PrefetchScalarGridSpec(
            num_scalar_prefetch=0,
            grid=(n_nb, n_tt),
            in_specs=[x_spec, w_spec, col_spec],
            out_specs=[lane_spec, lane_spec],
        ),
        compiler_params=pltpu.CompilerParams(
            dimension_semantics=("parallel", "arbitrary"),
            vmem_limit_bytes=budget),
    )(xp, w2d, b2d)

    # Tiny final reductions (O(N*H*128)) in the wrapper -- done once, not per step.
    count = float(N * T)
    sum_c = jnp.sum(sums, axis=(0, 2)).reshape(H, 1)
    sumsq_c = jnp.sum(sumsqs, axis=(0, 2)).reshape(H, 1)
    mean = sum_c / count
    var = jnp.maximum(sumsq_c / count - mean * mean, 0.0)   # biased variance
    inv = jax.lax.rsqrt(var + eps)                          # (H, 1), > 0

    # Fold the batchnorm scale into the conv (inv > 0 commutes with relu):
    #   (relu(w x + b) - mean) * inv == relu((inv*w) x + inv*b) - inv*mean
    w_s = w2d * inv
    b_s = b2d * inv
    m_s = mean * inv

    # ---- Pass 2: recompute + normalize, output lane-dense in (N, H, T_pad) ----
    def normalize_kernel(x_ref, w_ref, b_ref, m_ref, o_ref):
        w = w_ref[...]
        b = b_ref[...]
        m = m_ref[...]
        for i in range(Nb):
            y = _affine_relu(x_ref[i], w, b)                 # (H, tt)
            o_ref[i] = (y - m).astype(o_ref.dtype)
        # TODO(synk): SharedDimScaleDropout with alpha > 0 (time-tied uniform
        # scale mask via pltpu.prng_random_bits); alpha=0.0 (default) is identity.

    out = pl.pallas_call(
        normalize_kernel,
        out_shape=jax.ShapeDtypeStruct((N, H, T_pad), out_dtype),
        grid_spec=pltpu.PrefetchScalarGridSpec(
            num_scalar_prefetch=0,
            grid=(n_nb, n_tt),
            in_specs=[x_spec, w_spec, col_spec, col_spec],
            out_specs=pl.BlockSpec((Nb, H, tt), lambda n, t: (n, 0, t)),
        ),
        compiler_params=pltpu.CompilerParams(
            dimension_semantics=("parallel", "parallel"),
            vmem_limit_bytes=budget),
    )(xp, w_s, b_s, m_s)

    return out[:, :, :T] if padded else out


if __name__ == "__main__":
    key = jax.random.PRNGKey(0)
    k_x, k_w, k_b = jax.random.split(key, 3)

    N, C_IN, HIDDEN = 2, 4, 32

    # Conv1d(in=C_IN, out=HIDDEN, kernel_size=1) parameters (deterministic).
    weight = jax.random.normal(k_w, (HIDDEN, C_IN, 1), dtype=jnp.float32) * 0.1
    bias = jax.random.normal(k_b, (HIDDEN,), dtype=jnp.float32) * 0.1

    def reference(x):
        y = jnp.einsum("hc,nct->nht", weight[:, :, 0], x) + bias[None, :, None]
        y = jnp.maximum(y, 0.0)
        mean = jnp.mean(y, axis=(0, 2), keepdims=True)
        var = jnp.mean((y - mean) ** 2, axis=(0, 2), keepdims=True)
        return (y - mean) / jnp.sqrt(var + EPS)

    def check(out, x, name):
        ref = reference(x)
        assert out.shape == ref.shape, (name, out.shape, ref.shape)
        err = float(jnp.max(jnp.abs(out - ref)))
        assert jnp.allclose(out, ref, atol=1e-4, rtol=1e-4), (name, err)

    # 1) T multiple of 128, forced 128-wide time tiles -> grid (2 batch x 2 time):
    #    exercises cross-tile stats accumulation + per-batch parallel partials.
    x1 = jax.random.normal(k_x, (N, C_IN, 256), dtype=jnp.float32)
    o1 = jax.block_until_ready(tdnn_forward(x1, weight, bias, time_tile=128))
    check(o1, x1, "tiled")

    # 2) Auto tiling -> full-T tile + batch blocking (single grid step per pass).
    o2 = jax.block_until_ready(tdnn_forward(x1, weight, bias))
    check(o2, x1, "auto")

    # 3) T not a multiple of 128 -> wrapper padding + stats lane masking.
    x3 = jax.random.normal(k_x, (N, C_IN, 200), dtype=jnp.float32)
    o3 = jax.block_until_ready(tdnn_forward(x3, weight, bias, time_tile=128))
    check(o3, x3, "padded")

    print("KERNEL_OK")
</pallas_src>

<mosaic_0001>
module attributes {stable_mosaic.version = 11 : i64} {
  func.func @stats_kernel(%arg0: i32, %arg1: i32, %arg2: memref<1x4x128xf32, #tpu.memory_space<vmem>>, %arg3: memref<32x4xf32, #tpu.memory_space<vmem>>, %arg4: memref<32x1xf32, #tpu.memory_space<vmem>>, %arg5: memref<1x32x128xf32, #tpu.memory_space<vmem>>, %arg6: memref<1x32x128xf32, #tpu.memory_space<vmem>>) attributes {dimension_semantics = [#tpu.dimension_semantics<parallel>, #tpu.dimension_semantics<arbitrary>], iteration_bounds = array<i64: 2, 2>, scalar_prefetch = 0 : i64, scratch_operands = 0 : i64, tpu.core_type = #tpu.core_type<tc>, window_params = [{transform_indices = @transform_0, window_bounds = array<i64: 1, 4, 128>}, {pipeline_mode = #tpu.pipeline_mode<synchronous>, transform_indices = @transform_1, window_bounds = array<i64: 32, 4>}, {pipeline_mode = #tpu.pipeline_mode<synchronous>, transform_indices = @transform_2, window_bounds = array<i64: 32, 1>}, {transform_indices = @transform_3, window_bounds = array<i64: 1, 32, 128>}, {transform_indices = @transform_4, window_bounds = array<i64: 1, 32, 128>}]} {
    %c0_i32 = arith.constant 0 : i32
    %0 = arith.cmpi eq, %arg1, %c0_i32 : i32
    %1 = arith.extui %0 : i1 to i32
    %c0_i32_0 = arith.constant 0 : i32
    %2 = arith.cmpi ne, %1, %c0_i32_0 : i32
    scf.if %2 {
      %cst_21 = arith.constant 0.000000e+00 : f32
      %51 = vector.broadcast %cst_21 : f32 to vector<32x128xf32>
      %c0_22 = arith.constant 0 : index
      %c0_23 = arith.constant 0 : index
      %c0_24 = arith.constant 0 : index
      %52 = vector.load %arg5[%c0_22, %c0_23, %c0_24] : memref<1x32x128xf32, #tpu.memory_space<vmem>>, vector<1x32x128xf32>
      %53 = vector.shape_cast %52 : vector<1x32x128xf32> to vector<32x128xf32>
      %54 = vector.shape_cast %51 : vector<32x128xf32> to vector<1x32x128xf32>
      tpu.vector_store %arg5[%c0_22, %c0_23, %c0_24], %54 {strides = array<i32>} : memref<1x32x128xf32, #tpu.memory_space<vmem>>, vector<1x32x128xf32>,
      %cst_25 = arith.constant 0.000000e+00 : f32
      %55 = vector.broadcast %cst_25 : f32 to vector<32x128xf32>
      %c0_26 = arith.constant 0 : index
      %c0_27 = arith.constant 0 : index
      %c0_28 = arith.constant 0 : index
      %56 = vector.load %arg6[%c0_26, %c0_27, %c0_28] : memref<1x32x128xf32, #tpu.memory_space<vmem>>, vector<1x32x128xf32>
      %57 = vector.shape_cast %56 : vector<1x32x128xf32> to vector<32x128xf32>
      %58 = vector.shape_cast %55 : vector<32x128xf32> to vector<1x32x128xf32>
      tpu.vector_store %arg6[%c0_26, %c0_27, %c0_28], %58 {strides = array<i32>} : memref<1x32x128xf32, #tpu.memory_space<vmem>>, vector<1x32x128xf32>,
    } else {
    }
    %c0 = arith.constant 0 : index
    %c0_1 = arith.constant 0 : index
    %3 = vector.load %arg3[%c0, %c0_1] : memref<32x4xf32, #tpu.memory_space<vmem>>, vector<32x4xf32>
    %c0_2 = arith.constant 0 : index
    %c0_3 = arith.constant 0 : index
    %4 = vector.load %arg4[%c0_2, %c0_3] : memref<32x1xf32, #tpu.memory_space<vmem>>, vector<32x1xf32>
    %cst = arith.constant 0.000000e+00 : f32
    %5 = vector.broadcast %cst : f32 to vector<32x128xf32>
    %cst_4 = arith.constant 0.000000e+00 : f32
    %6 = vector.broadcast %cst_4 : f32 to vector<32x128xf32>
    %c0_5 = arith.constant 0 : index
    %c0_6 = arith.constant 0 : index
    %c0_7 = arith.constant 0 : index
    %7 = vector.load %arg2[%c0_5, %c0_6, %c0_7] : memref<1x4x128xf32, #tpu.memory_space<vmem>>, vector<1x4x128xf32>
    %8 = vector.shape_cast %7 : vector<1x4x128xf32> to vector<4x128xf32>
    %9 = vector.extract_strided_slice %3 {offsets = [0, 0], sizes = [32, 1], strides = [1, 1]} : vector<32x4xf32> to vector<32x1xf32>
    %10 = vector.extract_strided_slice %8 {offsets = [0, 0], sizes = [1, 128], strides = [1, 1]} : vector<4x128xf32> to vector<1x128xf32>
    %11 = vector.broadcast %9 : vector<32x1xf32> to vector<32x128xf32>
    %12 = vector.broadcast %10 : vector<1x128xf32> to vector<32x128xf32>
    %13 = arith.mulf %11, %12 : vector<32x128xf32>
    %14 = vector.extract_strided_slice %3 {offsets = [0, 1], sizes = [32, 1], strides = [1, 1]} : vector<32x4xf32> to vector<32x1xf32>
    %15 = vector.extract_strided_slice %8 {offsets = [1, 0], sizes = [1, 128], strides = [1, 1]} : vector<4x128xf32> to vector<1x128xf32>
    %16 = vector.broadcast %14 : vector<32x1xf32> to vector<32x128xf32>
    %17 = vector.broadcast %15 : vector<1x128xf32> to vector<32x128xf32>
    %18 = arith.mulf %16, %17 : vector<32x128xf32>
    %19 = arith.addf %13, %18 : vector<32x128xf32>
    %20 = vector.extract_strided_slice %3 {offsets = [0, 2], sizes = [32, 1], strides = [1, 1]} : vector<32x4xf32> to vector<32x1xf32>
    %21 = vector.extract_strided_slice %8 {offsets = [2, 0], sizes = [1, 128], strides = [1, 1]} : vector<4x128xf32> to vector<1x128xf32>
    %22 = vector.broadcast %20 : vector<32x1xf32> to vector<32x128xf32>
    %23 = vector.broadcast %21 : vector<1x128xf32> to vector<32x128xf32>
    %24 = arith.mulf %22, %23 : vector<32x128xf32>
    %25 = arith.addf %19, %24 : vector<32x128xf32>
    %26 = vector.extract_strided_slice %3 {offsets = [0, 3], sizes = [32, 1], strides = [1, 1]} : vector<32x4xf32> to vector<32x1xf32>
    %27 = vector.extract_strided_slice %8 {offsets = [3, 0], sizes = [1, 128], strides = [1, 1]} : vector<4x128xf32> to vector<1x128xf32>
    %28 = vector.broadcast %26 : vector<32x1xf32> to vector<32x128xf32>
    %29 = vector.broadcast %27 : vector<1x128xf32> to vector<32x128xf32>
    %30 = arith.mulf %28, %29 : vector<32x128xf32>
    %31 = arith.addf %25, %30 : vector<32x128xf32>
    %32 = vector.broadcast %4 : vector<32x1xf32> to vector<32x128xf32>
    %33 = arith.addf %31, %32 : vector<32x128xf32>
    %cst_8 = arith.constant 0.000000e+00 : f32
    %34 = vector.broadcast %cst_8 : f32 to vector<32x128xf32>
    %35 = arith.maximumf %33, %34 : vector<32x128xf32>
    %36 = arith.addf %5, %35 : vector<32x128xf32>
    %37 = arith.mulf %35, %35 : vector<32x128xf32>
    %38 = arith.addf %6, %37 : vector<32x128xf32>
    %c0_9 = arith.constant 0 : index
    %c0_10 = arith.constant 0 : index
    %c0_11 = arith.constant 0 : index
    %39 = vector.load %arg5[%c0_9, %c0_10, %c0_11] : memref<1x32x128xf32, #tpu.memory_space<vmem>>, vector<1x32x128xf32>
    %40 = vector.shape_cast %39 : vector<1x32x128xf32> to vector<32x128xf32>
    %41 = arith.addf %40, %36 : vector<32x128xf32>
    %c0_12 = arith.constant 0 : index
    %c0_13 = arith.constant 0 : index
    %c0_14 = arith.constant 0 : index
    %42 = vector.load %arg5[%c0_12, %c0_13, %c0_14] : memref<1x32x128xf32, #tpu.memory_space<vmem>>, vector<1x32x128xf32>
    %43 = vector.shape_cast %42 : vector<1x32x128xf32> to vector<32x128xf32>
    %44 = vector.shape_cast %41 : vector<32x128xf32> to vector<1x32x128xf32>
    tpu.vector_store %arg5[%c0_12, %c0_13, %c0_14], %44 {strides = array<i32>} : memref<1x32x128xf32, #tpu.memory_space<vmem>>, vector<1x32x128xf32>,
    %c0_15 = arith.constant 0 : index
    %c0_16 = arith.constant 0 : index
    %c0_17 = arith.constant 0 : index
    %45 = vector.load %arg6[%c0_15, %c0_16, %c0_17] : memref<1x32x128xf32, #tpu.memory_space<vmem>>, vector<1x32x128xf32>
    %46 = vector.shape_cast %45 : vector<1x32x128xf32> to vector<32x128xf32>
    %47 = arith.addf %46, %38 : vector<32x128xf32>
    %c0_18 = arith.constant 0 : index
    %c0_19 = arith.constant 0 : index
    %c0_20 = arith.constant 0 : index
    %48 = vector.load %arg6[%c0_18, %c0_19, %c0_20] : memref<1x32x128xf32, #tpu.memory_space<vmem>>, vector<1x32x128xf32>
    %49 = vector.shape_cast %48 : vector<1x32x128xf32> to vector<32x128xf32>
    %50 = vector.shape_cast %47 : vector<32x128xf32> to vector<1x32x128xf32>
    tpu.vector_store %arg6[%c0_18, %c0_19, %c0_20], %50 {strides = array<i32>} : memref<1x32x128xf32, #tpu.memory_space<vmem>>, vector<1x32x128xf32>,
    return
  }
  func.func @transform_0(%arg0: i32, %arg1: i32) -> (i32, i32, i32) {
    %c0_i32 = arith.constant 0 : i32
    %c0_i32_0 = arith.constant 0 : i32
    return %arg0, %c0_i32, %arg1 : i32, i32, i32
  }
  func.func @transform_1(%arg0: i32, %arg1: i32) -> (i32, i32) {
    %c0_i32 = arith.constant 0 : i32
    %c0_i32_0 = arith.constant 0 : i32
    %c0_i32_1 = arith.constant 0 : i32
    return %c0_i32, %c0_i32_0 : i32, i32
  }
  func.func @transform_2(%arg0: i32, %arg1: i32) -> (i32, i32) {
    %c0_i32 = arith.constant 0 : i32
    %c0_i32_0 = arith.constant 0 : i32
    %c0_i32_1 = arith.constant 0 : i32
    return %c0_i32, %c0_i32_0 : i32, i32
  }
  func.func @transform_3(%arg0: i32, %arg1: i32) -> (i32, i32, i32) {
    %c0_i32 = arith.constant 0 : i32
    %c0_i32_0 = arith.constant 0 : i32
    %c0_i32_1 = arith.constant 0 : i32
    return %arg0, %c0_i32, %c0_i32_0 : i32, i32, i32
  }
  func.func @transform_4(%arg0: i32, %arg1: i32) -> (i32, i32, i32) {
    %c0_i32 = arith.constant 0 : i32
    %c0_i32_0 = arith.constant 0 : i32
    %c0_i32_1 = arith.constant 0 : i32
    return %arg0, %c0_i32, %c0_i32_0 : i32, i32, i32
  }
}

</mosaic_0001>

<llo_original>
// kernel: tpu_custom_call.1
$region0: #{tpu_custom_call.1}
  #allocation0 [shape = 'u32[]', space=smem, size = 0x4, offset = 0x4, fixed_abs, tag = 'smem constant byte address 0x4 - core index']
  #allocation1 [shape = 'u32[72,128]{1,0:T(1,128)}', space=vmem, size = 0x9000, scoped, tag = 'internal scratch']
  %s0 = inlined_call_operand.vmem [shape: f32[2,4,256], index: 0, kind: input, shape index: {}]
  %s1 = inlined_call_operand.vmem [shape: f32[32,4], index: 1, kind: input, shape index: {}]
  %s2 = inlined_call_operand.vmem [shape: f32[32,1], index: 2, kind: input, shape index: {}]
  %s3 = inlined_call_operand.hbm [shape: f32[2,32,128], index: 3, kind: output, shape index: {0}]
  %s4 = inlined_call_operand.hbm [shape: f32[2,32,128], index: 4, kind: output, shape index: {1}]
  %5 = xla_tuple %s3, %s4
  %s6 = sld [smem:[#allocation0]]
  $region57: #{tpu_custom_call.1} parent=0
    _
  %s8 = ssub.s32 1, %s6
  %s9 = scalar_select 0, %s8, %s6
  $region1: #{tpu_custom_call.1} parent=0
    #allocation2 [shape = 'u8[32768]{0}', space=vmem, size = 0x8000, scoped, tag = 'output window, operand 0']
    #allocation3 [shape = 's32[2]{0}', space=sflag, size = 0x8, scoped, tag = 'scoped memory for tpu_custom_call.1']
    #allocation4 [shape = 'u8[32768]{0}', space=vmem, size = 0x8000, scoped, tag = 'output window, operand 1']
    #allocation5 [shape = 's32[2]{0}', space=sflag, size = 0x8, scoped, tag = 'scoped memory for tpu_custom_call.1']
    %10 = vsyncpa [#allocation3], 0
    %s11 = scalar_lea.sflag [#allocation3], 1
    %12 = vsyncpa %s11, 0
    %13 = vsyncpa [#allocation5], 0
    %s14 = scalar_lea.sflag [#allocation5], 1
    %15 = vsyncpa %s14, 0
    loop: start=0, step=1, limit=6
    $region2: #{tpu_custom_call.1} parent=1 // loop_pre_header
      _
    $region3: #{tpu_custom_call.1} parent=1 // loop_header
      %s17 = sphi 0, %s21
      %p18 = scmp.ge.s32.totalorder %s17, 6
      %s24 = sphi 0, %s36
      %s25 = sphi 0, %s32
      %s26 = sphi 0, %s24
      %s27 = sphi 0, %s25
      %s28 = sphi 0, %s26
      %s29 = sphi 0, %s27
      %s41 = sphi 0, %s43
      %s44 = sphi 0, %s41
      %s45 = sphi 0, %s44
      %s61 = sphi 0, %s45
      %s65 = sphi 0, %s65
      %s67 = sphi 0, %s65
      %s68 = sphi 0, %s67
      %s82 = sphi 0, %s68
      %s86 = sphi 0, %s86
      %s88 = sphi 0, %s86
      %s89 = sphi 0, %s88
      %s103 = sphi 0, %s89
      %s109 = sphi 0, %s111
      %s112 = sphi 0, %s109
      %s113 = sphi 0, %s112
      %s129 = sphi 0, %s113
      %s135 = sphi 0, %s137
      %s138 = sphi 0, %s135
      %s139 = sphi 0, %s138
      %s155 = sphi 0, %s139
    $region4: #{tpu_custom_call.1} parent=1 // loop_header_branch
      %20 = sbr.rel (%p18) target = $region8
    $region5: #{tpu_custom_call.1} parent=1 // loop_body
      %s22 = ssub.s32 %s17, 1
      %s23 = ssub.s32 %s17, 2
      %s30 = sadd.s32 1, %s25
      %p31 = scmp.ge.s32.totalorder %s30, 2
      %s32 = scalar_select %p31, 0, %s30
      %s33 = sadd.s32 1, %s24
      %s34 = scalar_select %p31, %s33, %s24
      %p35 = scmp.ge.s32.totalorder %s34, 2
      %s36 = scalar_select %p35, 0, %s34
      %s37 = ssub.s32 %s24, %s36
      %s38 = ssub.s32 %s25, %s32
      %s39 = sor.u32 %s37, %s38
      %p40 = scmp.eq.s32.totalorder %s39, 0
      %s42 = sadd.s32 %s41, 1
      %s43 = scalar_select %p40, %s41, %s42
      %p46 = pneg %p40
      %p47 = scmp.eq.s32.totalorder %s17, 3
      %p48 = por %p46, %p47
      %p49 = scmp.ne.s32.totalorder %s41, %s44
      %p50 = scmp.eq.s32.totalorder %s17, 0
      %p51 = por %p49, %p50
      %p52 = scmp.ne.s32.totalorder %s41, %s44
      %p53 = scmp.eq.s32.totalorder %s22, 3
      %p54 = por %p52, %p53
      %p55 = scmp.ne.s32.totalorder %s44, %s45
      %p56 = scmp.eq.s32.totalorder %s22, 0
      %p57 = por %p55, %p56
      %p58 = scmp.ne.s32.totalorder %s44, %s45
      %p59 = scmp.eq.s32.totalorder %s23, 3
      %p60 = por %p58, %p59
      %p62 = scmp.ne.s32.totalorder %s45, %s61
      %p63 = scmp.eq.s32.totalorder %s23, 0
      %p64 = por %p62, %p63
      %s66 = sadd.s32 %s65, 1
      %p69 = scmp.eq.s32.totalorder %s17, 3
      %p70 = scmp.ne.s32.totalorder %s65, %s67
      %p71 = scmp.eq.s32.totalorder %s17, 0
      %p72 = por %p70, %p71
      %p73 = scmp.ne.s32.totalorder %s65, %s67
      %p74 = scmp.eq.s32.totalorder %s22, 3
      %p75 = por %p73, %p74
      %p76 = scmp.ne.s32.totalorder %s67, %s68
      %p77 = scmp.eq.s32.totalorder %s22, 0
      %p78 = por %p76, %p77
      %p79 = scmp.ne.s32.totalorder %s67, %s68
      %p80 = scmp.eq.s32.totalorder %s23, 3
      %p81 = por %p79, %p80
      %p83 = scmp.ne.s32.totalorder %s68, %s82
      %p84 = scmp.eq.s32.totalorder %s23, 0
      %p85 = por %p83, %p84
      %s87 = sadd.s32 %s86, 1
      %p90 = scmp.eq.s32.totalorder %s17, 3
      %p91 = scmp.ne.s32.totalorder %s86, %s88
      %p92 = scmp.eq.s32.totalorder %s17, 0
      %p93 = por %p91, %p92
      %p94 = scmp.ne.s32.totalorder %s86, %s88
      %p95 = scmp.eq.s32.totalorder %s22, 3
      %p96 = por %p94, %p95
      %p97 = scmp.ne.s32.totalorder %s88, %s89
      %p98 = scmp.eq.s32.totalorder %s22, 0
      %p99 = por %p97, %p98
      %p100 = scmp.ne.s32.totalorder %s88, %s89
      %p101 = scmp.eq.s32.totalorder %s23, 3
      %p102 = por %p100, %p101
      %p104 = scmp.ne.s32.totalorder %s89, %s103
      %p105 = scmp.eq.s32.totalorder %s23, 0
      %p106 = por %p104, %p105
      %s107 = ssub.s32 %s24, %s36
      %p108 = scmp.eq.s32.totalorder %s107, 0
      %s110 = sadd.s32 %s109, 1
      %s111 = scalar_select %p108, %s109, %s110
      %p114 = pneg %p108
      %p115 = scmp.eq.s32.totalorder %s17, 3
      %p116 = por %p114, %p115
      %p117 = scmp.ne.s32.totalorder %s109, %s112
      %p118 = scmp.eq.s32.totalorder %s17, 0
      %p119 = por %p117, %p118
      %p120 = scmp.ne.s32.totalorder %s109, %s112
      %p121 = scmp.eq.s32.totalorder %s22, 3
      %p122 = por %p120, %p121
      %p123 = scmp.ne.s32.totalorder %s112, %s113
      %p124 = scmp.eq.s32.totalorder %s22, 0
      %p125 = por %p123, %p124
      %p126 = scmp.ne.s32.totalorder %s112, %s113
      %p127 = scmp.eq.s32.totalorder %s23, 3
      %p128 = por %p126, %p127
      %p130 = scmp.ne.s32.totalorder %s113, %s129
      %p131 = scmp.eq.s32.totalorder %s23, 0
      %p132 = por %p130, %p131
      %s133 = ssub.s32 %s24, %s36
      %p134 = scmp.eq.s32.totalorder %s133, 0
      %s136 = sadd.s32 %s135, 1
      %s137 = scalar_select %p134, %s135, %s136
      %p140 = pneg %p134
      %p141 = scmp.eq.s32.totalorder %s17, 3
      %p142 = por %p140, %p141
      %p143 = scmp.ne.s32.totalorder %s135, %s138
      %p144 = scmp.eq.s32.totalorder %s17, 0
      %p145 = por %p143, %p144
      %p146 = scmp.ne.s32.totalorder %s135, %s138
      %p147 = scmp.eq.s32.totalorder %s22, 3
      %p148 = por %p146, %p147
      %p149 = scmp.ne.s32.totalorder %s138, %s139
      %p150 = scmp.eq.s32.totalorder %s22, 0
      %p151 = por %p149, %p150
      %p152 = scmp.ne.s32.totalorder %s138, %s139
      %p153 = scmp.eq.s32.totalorder %s23, 3
      %p154 = por %p152, %p153
      %p156 = scmp.ne.s32.totalorder %s139, %s155
      %p157 = scmp.eq.s32.totalorder %s23, 0
      %p158 = por %p156, %p157
      %p159 = scmp.le.s32.totalorder 1, %s17
      %p160 = scmp.lt.s32.totalorder %s17, 5
      %p161 = pnand %p159, %p160
      %p162 = pneg %p161
      // Predicated region
      $region9: #{tpu_custom_call.1} parent=5 // pred_check
        _
      $region10: #{tpu_custom_call.1} parent=5 // pred_check_branch
        %164 = sbr.rel (%p161) target = $region12
      $region11: #{tpu_custom_call.1} parent=5 // pred_region
        %s165 = ssub.s32 %s17, 1
        // Predicated region
        $region13: #{tpu_custom_call.1} parent=11 // pred_check
          %p166 = pneg %p78
        $region14: #{tpu_custom_call.1} parent=11 // pred_check_branch
          %168 = sbr.rel (%p166) target = $region16
        $region15: #{tpu_custom_call.1} parent=11 // pred_region
          _
        $region16: #{tpu_custom_call.1} parent=11 // pred_fallthru
          _
        // Predicated region
        $region17: #{tpu_custom_call.1} parent=11 // pred_check
          %p169 = pneg %p99
        $region18: #{tpu_custom_call.1} parent=11 // pred_check_branch
          %171 = sbr.rel (%p169) target = $region20
        $region19: #{tpu_custom_call.1} parent=11 // pred_region
          _
        $region20: #{tpu_custom_call.1} parent=11 // pred_fallthru
          _
      $region12: #{tpu_custom_call.1} parent=5 // pred_fallthru
        _
      %p172 = scmp.lt.s32.totalorder %s17, 4
      // Predicated region
      $region21: #{tpu_custom_call.1} parent=5 // pred_check
        %p173 = pneg %p172
      $region22: #{tpu_custom_call.1} parent=5 // pred_check_branch
        %175 = sbr.rel (%p173) target = $region24
      $region23: #{tpu_custom_call.1} parent=5 // pred_region
        // Predicated region
        $region25: #{tpu_custom_call.1} parent=23 // pred_check
          %p176 = pneg %p51
        $region26: #{tpu_custom_call.1} parent=23 // pred_check_branch
          %178 = sbr.rel (%p176) target = $region28
        $region27: #{tpu_custom_call.1} parent=23 // pred_region
          %p179 = scmp.lt.s32.totalorder %s24, 1
          %s180 = scalar_select %p179, %s24, 1
          %p181 = scmp.lt.s32.totalorder %s25, 1
          %s182 = scalar_select %p181, %s25, 1
          %s183 = smul.addr %s180, 2
          %s184 = sadd.s32 %s182, %s183
          %s185 = smul.addr %s184, 4
          %s186 = scalar_lea.vmem %s0, %s185
        $region28: #{tpu_custom_call.1} parent=23 // pred_fallthru
          _
      $region24: #{tpu_custom_call.1} parent=5 // pred_fallthru
        _
      %p187 = scmp.le.s32.totalorder 1, %s17
      %p188 = scmp.lt.s32.totalorder %s17, 5
      %p189 = pnand %p187, %p188
      %p190 = pneg %p189
      // Predicated region
      $region29: #{tpu_custom_call.1} parent=5 // pred_check
        _
      $region30: #{tpu_custom_call.1} parent=5 // pred_check_branch
        %192 = sbr.rel (%p189) target = $region32
      $region31: #{tpu_custom_call.1} parent=5 // pred_region
        %s193 = ssub.s32 %s17, 1
        %p194 = scmp.lt.s32.totalorder %s26, 1
        %s195 = scalar_select %p194, %s26, 1
        %p196 = scmp.lt.s32.totalorder %s27, 1
        %s197 = scalar_select %p196, %s27, 1
        %s198 = smul.addr %s195, 2
        %s199 = sadd.s32 %s197, %s198
        %s200 = smul.addr %s199, 4
        %s201 = scalar_lea.vmem %s0, %s200
        %p202 = pneg %p57
        %p203 = pneg %p54
        %p204 = pneg %p78
        %p205 = pneg %p75
        %p206 = pneg %p99
        %p207 = pneg %p96
        %p208 = pneg %p125
        %p209 = pneg %p122
        %s210 = sand.u32 %s112, 1
        %s211 = scalar_lea.sflag [#allocation3], %s210
        %s212 = sand.u32 %s112, 1
        %s213 = smul.addr %s212, 32
        %s214 = scalar_lea.vmem [#allocation2], %s213
        %p215 = pneg %p151
        %p216 = pneg %p148
        %s217 = sand.u32 %s138, 1
        %s218 = scalar_lea.sflag [#allocation5], %s217
        %s219 = sand.u32 %s138, 1
        %s220 = smul.addr %s219, 32
        %s221 = scalar_lea.vmem [#allocation4], %s220
        %p222 = scmp.lt.s32.totalorder %s26, 1
        %s223 = scalar_select %p222, %s26, 1
        %p224 = scmp.lt.s32.totalorder %s27, 1
        %s225 = scalar_select %p224, %s27, 1
        %s226 = smul.addr %s223, 2
        %s227 = sadd.s32 %s225, %s226
        %s228 = smul.addr %s227, 4
        %s229 = scalar_lea.vmem %s0, %s228
        %p230 = scmp.eq.s32.totalorder %s27, 0
        // Predicated region
        $region33: #{tpu_custom_call.1} parent=31 // pred_check
          %p231 = pneg %p230
        $region34: #{tpu_custom_call.1} parent=31 // pred_check_branch
          %233 = sbr.rel (%p231) target = $region36
        $region35: #{tpu_custom_call.1} parent=31 // pred_region
          %234 = vst [vmem:[%s214] sm:$0xff] 0.0
          %235 = vst [vmem:[%s214 + $0x8] sm:$0xff] 0.0
          %236 = vst [vmem:[%s214 + $0x10] sm:$0xff] 0.0
          %237 = vst [vmem:[%s214 + $0x18] sm:$0xff] 0.0
          %238 = vst [vmem:[%s221] sm:$0xff] 0.0
          %239 = vst [vmem:[%s221 + $0x8] sm:$0xff] 0.0
          %240 = vst [vmem:[%s221 + $0x10] sm:$0xff] 0.0
          %241 = vst [vmem:[%s221 + $0x18] sm:$0xff] 0.0
        $region36: #{tpu_custom_call.1} parent=31 // pred_fallthru
          _
        %v242 = vld [vmem:[%s1] sm:$0xff]
        %v243 = vld [vmem:[%s1 + $0x8] sm:$0xff]
        %v244 = vld [vmem:[%s1 + $0x10] sm:$0xff]
        %v245 = vld [vmem:[%s1 + $0x18] sm:$0xff]
        %v246 = vld [vmem:[%s2] sm:$0xff]
        %v247 = vld [vmem:[%s2 + $0x8] sm:$0xff]
        %v248 = vld [vmem:[%s2 + $0x10] sm:$0xff]
        %v249 = vld [vmem:[%s2 + $0x18] sm:$0xff]
        %v250 = vld [vmem:[%s229] sm:$0xf]
        %252 = vset.pattern.permute.xlu0 0
        %253 = vperm.xlu0 %252, %v242
        %v254 = vpop.permute.xlu0 %253
        %257 = vset.pattern.permute.xlu0 0
        %258 = vperm.xlu0 %257, %v243
        %v259 = vpop.permute.xlu0 %258
        %262 = vset.pattern.permute.xlu0 0
        %263 = vperm.xlu0 %262, %v244
        %v264 = vpop.permute.xlu0 %263
        %267 = vset.pattern.permute.xlu0 0
        %268 = vperm.xlu0 %267, %v245
        %v269 = vpop.permute.xlu0 %268
        %v271 = vperm.slane %v250, 0
        %v272 = vmul.f32 %v254, %v271
        %v273 = vmul.f32 %v259, %v271
        %v274 = vmul.f32 %v264, %v271
        %v275 = vmul.f32 %v269, %v271
        %276 = vset.pattern.permute.xlu0 1
        %277 = vperm.xlu0 %276, %v242
        %v278 = vpop.permute.xlu0 %277
        %280 = vset.pattern.permute.xlu0 1
        %281 = vperm.xlu0 %280, %v243
        %v282 = vpop.permute.xlu0 %281
        %284 = vset.pattern.permute.xlu0 1
        %285 = vperm.xlu0 %284, %v244
        %v286 = vpop.permute.xlu0 %285
        %288 = vset.pattern.permute.xlu0 1
        %289 = vperm.xlu0 %288, %v245
        %v290 = vpop.permute.xlu0 %289
        %v292 = vperm.slane %v250, 1
        %v293 = vmul.f32 %v278, %v292
        %v294 = vmul.f32 %v282, %v292
        %v295 = vmul.f32 %v286, %v292
        %v296 = vmul.f32 %v290, %v292
        %v297 = vadd.f32 %v272, %v293
        %v298 = vadd.f32 %v273, %v294
        %v299 = vadd.f32 %v274, %v295
        %v300 = vadd.f32 %v275, %v296
        %301 = vset.pattern.permute.xlu0 2
        %302 = vperm.xlu0 %301, %v242
        %v303 = vpop.permute.xlu0 %302
        %305 = vset.pattern.permute.xlu0 2
        %306 = vperm.xlu0 %305, %v243
        %v307 = vpop.permute.xlu0 %306
        %309 = vset.pattern.permute.xlu0 2
        %310 = vperm.xlu0 %309, %v244
        %v311 = vpop.permute.xlu0 %310
        %313 = vset.pattern.permute.xlu0 2
        %314 = vperm.xlu0 %313, %v245
        %v315 = vpop.permute.xlu0 %314
        %v317 = vperm.slane %v250, 2
        %v318 = vmul.f32 %v303, %v317
        %v319 = vmul.f32 %v307, %v317
        %v320 = vmul.f32 %v311, %v317
        %v321 = vmul.f32 %v315, %v317
        %v322 = vadd.f32 %v297, %v318
        %v323 = vadd.f32 %v298, %v319
        %v324 = vadd.f32 %v299, %v320
        %v325 = vadd.f32 %v300, %v321
        %326 = vset.pattern.permute.xlu0 3
        %327 = vperm.xlu0 %326, %v242
        %v328 = vpop.permute.xlu0 %327
        %330 = vset.pattern.permute.xlu0 3
        %331 = vperm.xlu0 %330, %v243
        %v332 = vpop.permute.xlu0 %331
        %334 = vset.pattern.permute.xlu0 3
        %335 = vperm.xlu0 %334, %v244
        %v336 = vpop.permute.xlu0 %335
        %338 = vset.pattern.permute.xlu0 3
        %339 = vperm.xlu0 %338, %v245
        %v340 = vpop.permute.xlu0 %339
        %v342 = vperm.slane %v250, 3
        %v343 = vmul.f32 %v328, %v342
        %v344 = vmul.f32 %v332, %v342
        %v345 = vmul.f32 %v336, %v342
        %v346 = vmul.f32 %v340, %v342
        %v347 = vadd.f32 %v322, %v343
        %v348 = vadd.f32 %v323, %v344
        %v349 = vadd.f32 %v324, %v345
        %v350 = vadd.f32 %v325, %v346
        %352 = vset.pattern.permute.xlu0 0
        %353 = vperm.xlu0 %352, %v246
        %v354 = vpop.permute.xlu0 %353
        %357 = vset.pattern.permute.xlu0 0
        %358 = vperm.xlu0 %357, %v247
        %v359 = vpop.permute.xlu0 %358
        %362 = vset.pattern.permute.xlu0 0
        %363 = vperm.xlu0 %362, %v248
        %v364 = vpop.permute.xlu0 %363
        %367 = vset.pattern.permute.xlu0 0
        %368 = vperm.xlu0 %367, %v249
        %v369 = vpop.permute.xlu0 %368
        %v371 = vadd.f32 %v347, %v354
        %v372 = vadd.f32 %v348, %v359
        %v373 = vadd.f32 %v349, %v364
        %v374 = vadd.f32 %v350, %v369
        %v375 = vmax.f32 %v371, 0.0
        %v376 = vmax.f32 %v372, 0.0
        %v377 = vmax.f32 %v373, 0.0
        %v378 = vmax.f32 %v374, 0.0
        %v379 = vadd.f32 %v375, 0.0
        %v380 = vadd.f32 %v376, 0.0
        %v381 = vadd.f32 %v377, 0.0
        %v382 = vadd.f32 %v378, 0.0
        %v383 = vmul.f32 %v375, %v375
        %v384 = vmul.f32 %v376, %v376
        %v385 = vmul.f32 %v377, %v377
        %v386 = vmul.f32 %v378, %v378
        %v387 = vadd.f32 %v383, 0.0
        %v388 = vadd.f32 %v384, 0.0
        %v389 = vadd.f32 %v385, 0.0
        %v390 = vadd.f32 %v386, 0.0
        %v391 = vld [vmem:[%s214] sm:$0xff]
        %v392 = vld [vmem:[%s214 + $0x8] sm:$0xff]
        %v393 = vld [vmem:[%s214 + $0x10] sm:$0xff]
        %v394 = vld [vmem:[%s214 + $0x18] sm:$0xff]
        %v395 = vadd.f32 %v391, %v379
        %v396 = vadd.f32 %v392, %v380
        %v397 = vadd.f32 %v393, %v381
        %v398 = vadd.f32 %v394, %v382
        %399 = vst [vmem:[%s214] sm:$0xff] %v395
        %400 = vst [vmem:[%s214 + $0x8] sm:$0xff] %v396
        %401 = vst [vmem:[%s214 + $0x10] sm:$0xff] %v397
        %402 = vst [vmem:[%s214 + $0x18] sm:$0xff] %v398
        %v403 = vld [vmem:[%s221] sm:$0xff]
        %v404 = vld [vmem:[%s221 + $0x8] sm:$0xff]
        %v405 = vld [vmem:[%s221 + $0x10] sm:$0xff]
        %v406 = vld [vmem:[%s221 + $0x18] sm:$0xff]
        %v407 = vadd.f32 %v403, %v387
        %v408 = vadd.f32 %v404, %v388
        %v409 = vadd.f32 %v405, %v389
        %v410 = vadd.f32 %v406, %v390
        %411 = vst [vmem:[%s221] sm:$0xff] %v407
        %412 = vst [vmem:[%s221 + $0x8] sm:$0xff] %v408
        %413 = vst [vmem:[%s221 + $0x10] sm:$0xff] %v409
        %414 = vst [vmem:[%s221 + $0x18] sm:$0xff] %v410
        %s415 = sand.u32 %s112, 1
        %s416 = scalar_lea.sflag [#allocation3], %s415
        %s417 = sand.u32 %s112, 1
        %s418 = smul.addr %s417, 32
        %s419 = scalar_lea.vmem [#allocation2], %s418
        %s420 = sand.u32 %s138, 1
        %s421 = scalar_lea.sflag [#allocation5], %s420
        %s422 = sand.u32 %s138, 1
        %s423 = smul.addr %s422, 32
        %s424 = scalar_lea.vmem [#allocation4], %s423
        // Predicated region
        $region37: #{tpu_custom_call.1} parent=31 // pred_check
          %p425 = pneg %p122
        $region38: #{tpu_custom_call.1} parent=31 // pred_check_branch
          %427 = sbr.rel (%p425) target = $region40
        $region39: #{tpu_custom_call.1} parent=31 // pred_region
          %429 = vsyncadd %s416, 0
          %s430 = smul.addr %s26, 4
          %s431 = smul.addr %s430, 8
          %s432 = scalar_lea.hbm %s3, %s431
          %s433 = sshll.u32 %s419, 4
          %s434 = int_to_ptr.vmem [resolvable:$true] %s433
          %s435 = sshll.u32 %s432, 4
          %s436 = int_to_ptr.hbm [resolvable:$true] %s435
          %441 = dma.vmem_to_hbm [thread:$0]  %s434, 512, %s436, %s416, 128, 128, 8
        $region40: #{tpu_custom_call.1} parent=31 // pred_fallthru
          _
        // Predicated region
        $region41: #{tpu_custom_call.1} parent=31 // pred_check
          %p442 = pneg %p148
        $region42: #{tpu_custom_call.1} parent=31 // pred_check_branch
          %444 = sbr.rel (%p442) target = $region44
        $region43: #{tpu_custom_call.1} parent=31 // pred_region
          %446 = vsyncadd %s421, 0
          %s447 = smul.addr %s26, 4
          %s448 = smul.addr %s447, 8
          %s449 = scalar_lea.hbm %s4, %s448
          %s450 = sshll.u32 %s424, 4
          %s451 = int_to_ptr.vmem [resolvable:$true] %s450
          %s452 = sshll.u32 %s449, 4
          %s453 = int_to_ptr.hbm [resolvable:$true] %s452
          %458 = dma.vmem_to_hbm [thread:$0]  %s451, 512, %s453, %s421, 128, 128, 8
        $region44: #{tpu_custom_call.1} parent=31 // pred_fallthru
          _
      $region32: #{tpu_custom_call.1} parent=5 // pred_fallthru
        _
      %p459 = scmp.le.s32.totalorder 2, %s17
      // Predicated region
      $region45: #{tpu_custom_call.1} parent=5 // pred_check
        %p460 = pneg %p459
      $region46: #{tpu_custom_call.1} parent=5 // pred_check_branch
        %462 = sbr.rel (%p460) target = $region48
      $region47: #{tpu_custom_call.1} parent=5 // pred_region
        %s463 = ssub.s32 %s17, 2
        // Predicated region
        $region49: #{tpu_custom_call.1} parent=47 // pred_check
          %p464 = pneg %p128
        $region50: #{tpu_custom_call.1} parent=47 // pred_check_branch
          %466 = sbr.rel (%p464) target = $region52
        $region51: #{tpu_custom_call.1} parent=47 // pred_region
          %s467 = sand.u32 %s113, 1
          %s468 = scalar_lea.sflag [#allocation3], %s467
          %s469 = sand.u32 %s113, 1
          %s470 = smul.addr %s469, 32
          %s471 = scalar_lea.vmem [#allocation2], %s470
          %473 = dma.done %s468, 512
        $region52: #{tpu_custom_call.1} parent=47 // pred_fallthru
          _
        // Predicated region
        $region53: #{tpu_custom_call.1} parent=47 // pred_check
          %p474 = pneg %p154
        $region54: #{tpu_custom_call.1} parent=47 // pred_check_branch
          %476 = sbr.rel (%p474) target = $region56
        $region55: #{tpu_custom_call.1} parent=47 // pred_region
          %s477 = sand.u32 %s139, 1
          %s478 = scalar_lea.sflag [#allocation5], %s477
          %s479 = sand.u32 %s139, 1
          %s480 = smul.addr %s479, 32
          %s481 = scalar_lea.vmem [#allocation4], %s480
          %483 = dma.done %s478, 512
        $region56: #{tpu_custom_call.1} parent=47 // pred_fallthru
          _
      $region48: #{tpu_custom_call.1} parent=5 // pred_fallthru
        _
    $region6: #{tpu_custom_call.1} parent=1 // loop_footer
      %s21 = sadd.s32 1, %s17
    $region7: #{tpu_custom_call.1} parent=1 // loop_footer_branch
      %16 = sbr.rel target = $region3
    $region8: #{tpu_custom_call.1} parent=1 // loop_exit
      _
    %484 = vsyncpa [#allocation3], 1
    %s485 = scalar_lea.sflag [#allocation3], 1
    %486 = vsyncpa %s485, 1
    %487 = vsyncpa [#allocation5], 1
    %s488 = scalar_lea.sflag [#allocation5], 1
    %489 = vsyncpa %s488, 1

</llo_original>
